<compile_context>
chip_gen: v5e
topology: v5e:2x2
jax: 0.10.0
libtpu: 0.0.40
codegen_flags: <defaults>
</compile_context>

<pallas_src>
import jax
import jax.numpy as jnp
from jax.experimental import pallas as pl
from jax.experimental.pallas import tpu as pltpu


def _round_up(x, m):
    return (x + m - 1) // m * m


def make_mlp_kernel(num_layers, compute_dtype):
    """Kernel computing the whole MLP on one lane-major batch tile.

    ref order: x_ref, (wt0, b0, wt1, b1, ..., wt_{L-1}, b_{L-1}), o_ref
      x_ref : (d_in, tile_m)   f32            (batch on the lane axis)
      wt_i  : (out_i, in_i)    compute_dtype  (torch-style weight, row = out)
      b_i   : (out_i, 1)       f32
      o_ref : (d_out, tile_m)  f32
    """

    def kernel(*refs):
        x_ref = refs[0]
        o_ref = refs[-1]
        param_refs = refs[1:-1]

        # Cast the activation once per layer; keep bias/tanh in f32 for accuracy.
        u = x_ref[...].astype(compute_dtype)                     # (d_in, tile_m)
        for i in range(num_layers):
            wt = param_refs[2 * i][...]                          # (out_i, in_i)
            b = param_refs[2 * i + 1][...]                       # (out_i, 1)
            # MXU: (out_i, in_i) @ (in_i, tile_m) -> (out_i, tile_m), f32 accumulate.
            acc = jnp.dot(wt, u, preferred_element_type=jnp.float32)
            acc = acc + b                                        # f32 bias (VPU, lane-dense)
            if i < num_layers - 1:
                u = jnp.tanh(acc).astype(compute_dtype)          # f32 tanh (EUP slot)
            else:
                u = acc
        o_ref[...] = u.astype(o_ref.dtype)

    return kernel


def pdenn_forward(xt, weights, biases, *, tile_m=512, use_bf16_matmul=True):
    """Pallas implementation of PDENN.forward.

    xt:       (N, dims[0]) float32
    weights:  list of (dims[i], dims[i+1]) float32   (u @ W convention)
    biases:   list of (1, dims[i+1]) float32
    returns:  (N, dims[-1]) float32
    """
    num_layers = len(weights)
    n, d_in = xt.shape
    d_out = weights[-1].shape[1]

    compute_dtype = jnp.bfloat16 if use_bf16_matmul else jnp.float32

    # Batch lives on the lane axis -> tile must be a multiple of 128 lanes.
    tile_m = max(128, min(_round_up(tile_m, 128), _round_up(n, 128)))
    n_pad = _round_up(n, tile_m)

    # (N, d_in) -> zero-padded (d_in, n_pad): features on sublanes, batch on lanes.
    # (Tiny one-off XLA pad+transpose; the kernel then sees only lane-dense tiles.)
    x_t = jnp.pad(xt, ((0, n_pad - n), (0, 0))).T

    # Tiny grid-invariant parameters: whole-array resident in VMEM (no pipelining).
    resident = pl.BlockSpec(memory_space=pltpu.MemorySpace.VMEM)

    in_specs = [pl.BlockSpec((d_in, tile_m), lambda i: (0, i))]
    params = []
    for w, b in zip(weights, biases):
        in_specs.extend([resident, resident])
        params.append(jnp.asarray(w, jnp.float32).T.astype(compute_dtype))  # (out, in)
        params.append(jnp.asarray(b, jnp.float32).reshape(-1, 1))           # (out, 1)

    out_spec = pl.BlockSpec((d_out, tile_m), lambda i: (0, i))

    out_t = pl.pallas_call(
        make_mlp_kernel(num_layers, compute_dtype),
        out_shape=jax.ShapeDtypeStruct((d_out, n_pad), jnp.float32),
        grid_spec=pltpu.PrefetchScalarGridSpec(
            num_scalar_prefetch=0,
            grid=(n_pad // tile_m,),
            in_specs=in_specs,
            out_specs=out_spec,
        ),
        compiler_params=pltpu.CompilerParams(
            dimension_semantics=("parallel",),
        ),
    )(x_t, *params)

    return out_t[:, :n].T  # back to (N, d_out)


def init_params(key, dims):
    """Deterministic init mimicking torch.nn.Linear default (uniform +/- 1/sqrt(fan_in))."""
    weights, biases = [], []
    for i in range(len(dims) - 1):
        fan_in, fan_out = dims[i], dims[i + 1]
        key, kw, kb = jax.random.split(key, 3)
        bound = 1.0 / jnp.sqrt(jnp.float32(fan_in))
        # stored as (in, out) so the reference does u @ W (== torch Linear's x @ weight.T)
        w = jax.random.uniform(kw, (fan_in, fan_out), jnp.float32, -bound, bound)
        b = jax.random.uniform(kb, (1, fan_out), jnp.float32, -bound, bound)
        weights.append(w)
        biases.append(b)
    return weights, biases


def pdenn_reference(xt, weights, biases):
    """Plain-JAX reference matching PDENN.forward semantics."""
    u = xt
    num_layers = len(weights)
    for i in range(num_layers):
        u = u @ weights[i] + biases[i]
        if i < num_layers - 1:
            u = jnp.tanh(u)
    return u


if __name__ == "__main__":
    # PDE-style MLP: (x, t) -> hidden -> hidden -> u
    dims = (2, 32, 32, 1)
    batch = 1000  # deliberately NOT a multiple of the tile -> exercises the ragged tail

    key = jax.random.PRNGKey(0)
    key, kx = jax.random.split(key)
    xt = jax.random.normal(kx, (batch, dims[0]), dtype=jnp.float32)
    weights, biases = init_params(key, dims)

    ref = pdenn_reference(xt, weights, biases)

    # f32-matmul path: exact torch-module semantics.
    out_f32 = jax.block_until_ready(
        pdenn_forward(xt, weights, biases, tile_m=512, use_bf16_matmul=False))
    assert out_f32.shape == (batch, dims[-1])
    assert jnp.allclose(out_f32, ref, atol=1e-5, rtol=1e-5), "f32 path mismatch vs reference"

    # bf16-operand matmul fast path (f32 accumulation + f32 bias/tanh).
    out_bf16 = jax.block_until_ready(
        pdenn_forward(xt, weights, biases, tile_m=512, use_bf16_matmul=True))
    assert out_bf16.shape == (batch, dims[-1])
    assert jnp.allclose(out_bf16, ref, atol=2e-2, rtol=2e-2), "bf16 path mismatch vs reference"

    print("KERNEL_OK")
</pallas_src>

<mosaic_0001>
module attributes {stable_mosaic.version = 11 : i64} {
  func.func @kernel(%arg0: i32, %arg1: memref<2x512xf32, #tpu.memory_space<vmem>>, %arg2: memref<32x2xf32, #tpu.memory_space<vmem>>, %arg3: memref<32x1xf32, #tpu.memory_space<vmem>>, %arg4: memref<32x32xf32, #tpu.memory_space<vmem>>, %arg5: memref<32x1xf32, #tpu.memory_space<vmem>>, %arg6: memref<1x32xf32, #tpu.memory_space<vmem>>, %arg7: memref<1x1xf32, #tpu.memory_space<vmem>>, %arg8: memref<1x512xf32, #tpu.memory_space<vmem>>) attributes {dimension_semantics = [#tpu.dimension_semantics<parallel>], iteration_bounds = array<i64: 2>, scalar_prefetch = 0 : i64, scratch_operands = 0 : i64, tpu.core_type = #tpu.core_type<tc>, window_params = [{transform_indices = @transform_0, window_bounds = array<i64: 2, 512>}, {pipeline_mode = #tpu.pipeline_mode<synchronous>, transform_indices = @transform_1, window_bounds = array<i64: 32, 2>}, {pipeline_mode = #tpu.pipeline_mode<synchronous>, transform_indices = @transform_2, window_bounds = array<i64: 32, 1>}, {pipeline_mode = #tpu.pipeline_mode<synchronous>, transform_indices = @transform_3, window_bounds = array<i64: 32, 32>}, {pipeline_mode = #tpu.pipeline_mode<synchronous>, transform_indices = @transform_4, window_bounds = array<i64: 32, 1>}, {pipeline_mode = #tpu.pipeline_mode<synchronous>, transform_indices = @transform_5, window_bounds = array<i64: 1, 32>}, {pipeline_mode = #tpu.pipeline_mode<synchronous>, transform_indices = @transform_6, window_bounds = array<i64: 1, 1>}, {transform_indices = @transform_7, window_bounds = array<i64: 1, 512>}]} {
    %c0 = arith.constant 0 : index
    %c0_0 = arith.constant 0 : index
    %0 = vector.load %arg1[%c0, %c0_0] : memref<2x512xf32, #tpu.memory_space<vmem>>, vector<2x512xf32>
    %c0_1 = arith.constant 0 : index
    %c0_2 = arith.constant 0 : index
    %1 = vector.load %arg2[%c0_1, %c0_2] : memref<32x2xf32, #tpu.memory_space<vmem>>, vector<32x2xf32>
    %c0_3 = arith.constant 0 : index
    %c0_4 = arith.constant 0 : index
    %2 = vector.load %arg3[%c0_3, %c0_4] : memref<32x1xf32, #tpu.memory_space<vmem>>, vector<32x1xf32>
    %cst = arith.constant dense<0.000000e+00> : vector<32x512xf32>
    %3 = tpu.matmul %1, %0, %cst {dimension_numbers = #tpu.dot_dimension_numbers<[1], [0], [0], [1], [0, 0, 1, 1], [], []>} : vector<32x2xf32>, vector<2x512xf32>, vector<32x512xf32> -> vector<32x512xf32>
    %4 = vector.broadcast %2 : vector<32x1xf32> to vector<32x512xf32>
    %5 = arith.addf %3, %4 : vector<32x512xf32>
    %6 = math.tanh %5 : vector<32x512xf32>
    %c0_5 = arith.constant 0 : index
    %c0_6 = arith.constant 0 : index
    %7 = vector.load %arg4[%c0_5, %c0_6] : memref<32x32xf32, #tpu.memory_space<vmem>>, vector<32x32xf32>
    %c0_7 = arith.constant 0 : index
    %c0_8 = arith.constant 0 : index
    %8 = vector.load %arg5[%c0_7, %c0_8] : memref<32x1xf32, #tpu.memory_space<vmem>>, vector<32x1xf32>
    %cst_9 = arith.constant dense<0.000000e+00> : vector<32x512xf32>
    %9 = tpu.matmul %7, %6, %cst_9 {dimension_numbers = #tpu.dot_dimension_numbers<[1], [0], [0], [1], [0, 0, 1, 1], [], []>} : vector<32x32xf32>, vector<32x512xf32>, vector<32x512xf32> -> vector<32x512xf32>
    %10 = vector.broadcast %8 : vector<32x1xf32> to vector<32x512xf32>
    %11 = arith.addf %9, %10 : vector<32x512xf32>
    %12 = math.tanh %11 : vector<32x512xf32>
    %c0_10 = arith.constant 0 : index
    %c0_11 = arith.constant 0 : index
    %13 = vector.load %arg6[%c0_10, %c0_11] : memref<1x32xf32, #tpu.memory_space<vmem>>, vector<1x32xf32>
    %c0_12 = arith.constant 0 : index
    %c0_13 = arith.constant 0 : index
    %14 = vector.load %arg7[%c0_12, %c0_13] : memref<1x1xf32, #tpu.memory_space<vmem>>, vector<1x1xf32>
    %cst_14 = arith.constant dense<0.000000e+00> : vector<1x512xf32>
    %15 = tpu.matmul %13, %12, %cst_14 {dimension_numbers = #tpu.dot_dimension_numbers<[1], [0], [0], [1], [0, 0, 1, 1], [], []>} : vector<1x32xf32>, vector<32x512xf32>, vector<1x512xf32> -> vector<1x512xf32>
    %16 = vector.broadcast %14 : vector<1x1xf32> to vector<1x512xf32>
    %17 = arith.addf %15, %16 : vector<1x512xf32>
    %c0_15 = arith.constant 0 : index
    %c0_16 = arith.constant 0 : index
    %18 = vector.load %arg8[%c0_15, %c0_16] : memref<1x512xf32, #tpu.memory_space<vmem>>, vector<1x512xf32>
    tpu.vector_store %arg8[%c0_15, %c0_16], %17 {strides = array<i32>} : memref<1x512xf32, #tpu.memory_space<vmem>>, vector<1x512xf32>,
    return
  }
  func.func @transform_0(%arg0: i32) -> (i32, i32) {
    %c0_i32 = arith.constant 0 : i32
    %c0_i32_0 = arith.constant 0 : i32
    return %c0_i32, %arg0 : i32, i32
  }
  func.func @transform_1(%arg0: i32) -> (i32, i32) {
    %c0_i32 = arith.constant 0 : i32
    %c0_i32_0 = arith.constant 0 : i32
    %c0_i32_1 = arith.constant 0 : i32
    return %c0_i32, %c0_i32_0 : i32, i32
  }
  func.func @transform_2(%arg0: i32) -> (i32, i32) {
    %c0_i32 = arith.constant 0 : i32
    %c0_i32_0 = arith.constant 0 : i32
    %c0_i32_1 = arith.constant 0 : i32
    return %c0_i32, %c0_i32_0 : i32, i32
  }
  func.func @transform_3(%arg0: i32) -> (i32, i32) {
    %c0_i32 = arith.constant 0 : i32
    %c0_i32_0 = arith.constant 0 : i32
    %c0_i32_1 = arith.constant 0 : i32
    return %c0_i32, %c0_i32_0 : i32, i32
  }
  func.func @transform_4(%arg0: i32) -> (i32, i32) {
    %c0_i32 = arith.constant 0 : i32
    %c0_i32_0 = arith.constant 0 : i32
    %c0_i32_1 = arith.constant 0 : i32
    return %c0_i32, %c0_i32_0 : i32, i32
  }
  func.func @transform_5(%arg0: i32) -> (i32, i32) {
    %c0_i32 = arith.constant 0 : i32
    %c0_i32_0 = arith.constant 0 : i32
    %c0_i32_1 = arith.constant 0 : i32
    return %c0_i32, %c0_i32_0 : i32, i32
  }
  func.func @transform_6(%arg0: i32) -> (i32, i32) {
    %c0_i32 = arith.constant 0 : i32
    %c0_i32_0 = arith.constant 0 : i32
    %c0_i32_1 = arith.constant 0 : i32
    return %c0_i32, %c0_i32_0 : i32, i32
  }
  func.func @transform_7(%arg0: i32) -> (i32, i32) {
    %c0_i32 = arith.constant 0 : i32
    %c0_i32_0 = arith.constant 0 : i32
    return %c0_i32, %arg0 : i32, i32
  }
}

</mosaic_0001>

<llo_original>
// kernel: tpu_custom_call.1
$region0: #{tpu_custom_call.1}
  #allocation0 [shape = 'u32[]', space=smem, size = 0x4, offset = 0x4, fixed_abs, tag = 'smem constant byte address 0x4 - core index']
  #allocation1 [shape = 'u32[72,128]{1,0:T(1,128)}', space=vmem, size = 0x9000, scoped, tag = 'internal scratch']
  #allocation2 [shape = 'f32[1,1]{1,0:T(1,128)S(1)}', space=vmem, size = 0x200, scoped, tag = 'scoped memory for tpu_custom_call.1']
  %s0 = inlined_call_operand.vmem [shape: f32[2,1024], index: 0, kind: input, shape index: {}]
  %s1 = inlined_call_operand.vmem [shape: f32[32,2], index: 1, kind: input, shape index: {}]
  %s2 = inlined_call_operand.vmem [shape: f32[32,1], index: 2, kind: input, shape index: {}]
  %s3 = inlined_call_operand.vmem [shape: f32[32,32], index: 3, kind: input, shape index: {}]
  %s4 = inlined_call_operand.vmem [shape: f32[32,1], index: 4, kind: input, shape index: {}]
  %s5 = inlined_call_operand.vmem [shape: f32[1,32], index: 5, kind: input, shape index: {}]
  %s6 = inlined_call_operand.<no memory space> [shape: f32[1,1], index: 6, kind: input, shape index: {}]
  %s7 = inlined_call_operand.hbm [shape: f32[1,1024], index: 7, kind: output, shape index: {}]
  %s8 = sld [smem:[#allocation0]]
  $region61: #{tpu_custom_call.1} parent=0
    _
  %s10 = ssub.s32 1, %s8
  %s11 = scalar_select 0, %s10, %s8
  %v12 = vstv %s6
  %13 = vst [vmem:[#allocation2] sm:$0x1] %v12
  $region1: #{tpu_custom_call.1} parent=0
    #allocation3 [shape = 'u8[4096]{0}', space=vmem, size = 0x1000, scoped, tag = 'output window, operand 0']
    #allocation4 [shape = 's32[2]{0}', space=sflag, size = 0x8, scoped, tag = 'scoped memory for tpu_custom_call.1']
    %14 = vsyncpa [#allocation4], 0
    %s15 = scalar_lea.sflag [#allocation4], 1
    %16 = vsyncpa %s15, 0
    loop: start=0, step=1, limit=4
    $region2: #{tpu_custom_call.1} parent=1 // loop_pre_header
      _
    $region3: #{tpu_custom_call.1} parent=1 // loop_header
      %s18 = sphi 0, %s22
      %p19 = scmp.ge.s32.totalorder %s18, 4
      %s28 = sphi 0, %s30
      %s31 = sphi 0, %s28
      %s32 = sphi 0, %s31
      %s48 = sphi 0, %s32
      %s52 = sphi 0, %s52
      %s54 = sphi 0, %s52
      %s55 = sphi 0, %s54
      %s69 = sphi 0, %s55
      %s73 = sphi 0, %s73
      %s75 = sphi 0, %s73
      %s76 = sphi 0, %s75
      %s90 = sphi 0, %s76
      %s94 = sphi 0, %s94
      %s96 = sphi 0, %s94
      %s97 = sphi 0, %s96
      %s111 = sphi 0, %s97
      %s115 = sphi 0, %s115
      %s117 = sphi 0, %s115
      %s118 = sphi 0, %s117
      %s132 = sphi 0, %s118
      %s136 = sphi 0, %s136
      %s138 = sphi 0, %s136
      %s139 = sphi 0, %s138
      %s153 = sphi 0, %s139
      %s157 = sphi 0, %s157
      %s159 = sphi 0, %s157
      %s160 = sphi 0, %s159
      %s174 = sphi 0, %s160
      %s180 = sphi 0, %s182
      %s183 = sphi 0, %s180
      %s184 = sphi 0, %s183
      %s200 = sphi 0, %s184
    $region4: #{tpu_custom_call.1} parent=1 // loop_header_branch
      %21 = sbr.rel (%p19) target = $region8
    $region5: #{tpu_custom_call.1} parent=1 // loop_body
      %s23 = ssub.s32 %s18, 1
      %s24 = ssub.s32 %s18, 2
      %s25 = sadd.s32 %s18, 1
      %s26 = ssub.s32 %s18, %s25
      %p27 = scmp.eq.s32.totalorder %s26, 0
      %s29 = sadd.s32 %s28, 1
      %s30 = scalar_select %p27, %s28, %s29
      %p33 = pneg %p27
      %p34 = scmp.eq.s32.totalorder %s18, 1
      %p35 = por %p33, %p34
      %p36 = scmp.ne.s32.totalorder %s28, %s31
      %p37 = scmp.eq.s32.totalorder %s18, 0
      %p38 = por %p36, %p37
      %p39 = scmp.ne.s32.totalorder %s28, %s31
      %p40 = scmp.eq.s32.totalorder %s23, 1
      %p41 = por %p39, %p40
      %p42 = scmp.ne.s32.totalorder %s31, %s32
      %p43 = scmp.eq.s32.totalorder %s23, 0
      %p44 = por %p42, %p43
      %p45 = scmp.ne.s32.totalorder %s31, %s32
      %p46 = scmp.eq.s32.totalorder %s24, 1
      %p47 = por %p45, %p46
      %p49 = scmp.ne.s32.totalorder %s32, %s48
      %p50 = scmp.eq.s32.totalorder %s24, 0
      %p51 = por %p49, %p50
      %s53 = sadd.s32 %s52, 1
      %p56 = scmp.eq.s32.totalorder %s18, 1
      %p57 = scmp.ne.s32.totalorder %s52, %s54
      %p58 = scmp.eq.s32.totalorder %s18, 0
      %p59 = por %p57, %p58
      %p60 = scmp.ne.s32.totalorder %s52, %s54
      %p61 = scmp.eq.s32.totalorder %s23, 1
      %p62 = por %p60, %p61
      %p63 = scmp.ne.s32.totalorder %s54, %s55
      %p64 = scmp.eq.s32.totalorder %s23, 0
      %p65 = por %p63, %p64
      %p66 = scmp.ne.s32.totalorder %s54, %s55
      %p67 = scmp.eq.s32.totalorder %s24, 1
      %p68 = por %p66, %p67
      %p70 = scmp.ne.s32.totalorder %s55, %s69
      %p71 = scmp.eq.s32.totalorder %s24, 0
      %p72 = por %p70, %p71
      %s74 = sadd.s32 %s73, 1
      %p77 = scmp.eq.s32.totalorder %s18, 1
      %p78 = scmp.ne.s32.totalorder %s73, %s75
      %p79 = scmp.eq.s32.totalorder %s18, 0
      %p80 = por %p78, %p79
      %p81 = scmp.ne.s32.totalorder %s73, %s75
      %p82 = scmp.eq.s32.totalorder %s23, 1
      %p83 = por %p81, %p82
      %p84 = scmp.ne.s32.totalorder %s75, %s76
      %p85 = scmp.eq.s32.totalorder %s23, 0
      %p86 = por %p84, %p85
      %p87 = scmp.ne.s32.totalorder %s75, %s76
      %p88 = scmp.eq.s32.totalorder %s24, 1
      %p89 = por %p87, %p88
      %p91 = scmp.ne.s32.totalorder %s76, %s90
      %p92 = scmp.eq.s32.totalorder %s24, 0
      %p93 = por %p91, %p92
      %s95 = sadd.s32 %s94, 1
      %p98 = scmp.eq.s32.totalorder %s18, 1
      %p99 = scmp.ne.s32.totalorder %s94, %s96
      %p100 = scmp.eq.s32.totalorder %s18, 0
      %p101 = por %p99, %p100
      %p102 = scmp.ne.s32.totalorder %s94, %s96
      %p103 = scmp.eq.s32.totalorder %s23, 1
      %p104 = por %p102, %p103
      %p105 = scmp.ne.s32.totalorder %s96, %s97
      %p106 = scmp.eq.s32.totalorder %s23, 0
      %p107 = por %p105, %p106
      %p108 = scmp.ne.s32.totalorder %s96, %s97
      %p109 = scmp.eq.s32.totalorder %s24, 1
      %p110 = por %p108, %p109
      %p112 = scmp.ne.s32.totalorder %s97, %s111
      %p113 = scmp.eq.s32.totalorder %s24, 0
      %p114 = por %p112, %p113
      %s116 = sadd.s32 %s115, 1
      %p119 = scmp.eq.s32.totalorder %s18, 1
      %p120 = scmp.ne.s32.totalorder %s115, %s117
      %p121 = scmp.eq.s32.totalorder %s18, 0
      %p122 = por %p120, %p121
      %p123 = scmp.ne.s32.totalorder %s115, %s117
      %p124 = scmp.eq.s32.totalorder %s23, 1
      %p125 = por %p123, %p124
      %p126 = scmp.ne.s32.totalorder %s117, %s118
      %p127 = scmp.eq.s32.totalorder %s23, 0
      %p128 = por %p126, %p127
      %p129 = scmp.ne.s32.totalorder %s117, %s118
      %p130 = scmp.eq.s32.totalorder %s24, 1
      %p131 = por %p129, %p130
      %p133 = scmp.ne.s32.totalorder %s118, %s132
      %p134 = scmp.eq.s32.totalorder %s24, 0
      %p135 = por %p133, %p134
      %s137 = sadd.s32 %s136, 1
      %p140 = scmp.eq.s32.totalorder %s18, 1
      %p141 = scmp.ne.s32.totalorder %s136, %s138
      %p142 = scmp.eq.s32.totalorder %s18, 0
      %p143 = por %p141, %p142
      %p144 = scmp.ne.s32.totalorder %s136, %s138
      %p145 = scmp.eq.s32.totalorder %s23, 1
      %p146 = por %p144, %p145
      %p147 = scmp.ne.s32.totalorder %s138, %s139
      %p148 = scmp.eq.s32.totalorder %s23, 0
      %p149 = por %p147, %p148
      %p150 = scmp.ne.s32.totalorder %s138, %s139
      %p151 = scmp.eq.s32.totalorder %s24, 1
      %p152 = por %p150, %p151
      %p154 = scmp.ne.s32.totalorder %s139, %s153
      %p155 = scmp.eq.s32.totalorder %s24, 0
      %p156 = por %p154, %p155
      %s158 = sadd.s32 %s157, 1
      %p161 = scmp.eq.s32.totalorder %s18, 1
      %p162 = scmp.ne.s32.totalorder %s157, %s159
      %p163 = scmp.eq.s32.totalorder %s18, 0
      %p164 = por %p162, %p163
      %p165 = scmp.ne.s32.totalorder %s157, %s159
      %p166 = scmp.eq.s32.totalorder %s23, 1
      %p167 = por %p165, %p166
      %p168 = scmp.ne.s32.totalorder %s159, %s160
      %p169 = scmp.eq.s32.totalorder %s23, 0
      %p170 = por %p168, %p169
      %p171 = scmp.ne.s32.totalorder %s159, %s160
      %p172 = scmp.eq.s32.totalorder %s24, 1
      %p173 = por %p171, %p172
      %p175 = scmp.ne.s32.totalorder %s160, %s174
      %p176 = scmp.eq.s32.totalorder %s24, 0
      %p177 = por %p175, %p176
      %s178 = ssub.s32 %s18, %s25
      %p179 = scmp.eq.s32.totalorder %s178, 0
      %s181 = sadd.s32 %s180, 1
      %s182 = scalar_select %p179, %s180, %s181
      %p185 = pneg %p179
      %p186 = scmp.eq.s32.totalorder %s18, 1
      %p187 = por %p185, %p186
      %p188 = scmp.ne.s32.totalorder %s180, %s183
      %p189 = scmp.eq.s32.totalorder %s18, 0
      %p190 = por %p188, %p189
      %p191 = scmp.ne.s32.totalorder %s180, %s183
      %p192 = scmp.eq.s32.totalorder %s23, 1
      %p193 = por %p191, %p192
      %p194 = scmp.ne.s32.totalorder %s183, %s184
      %p195 = scmp.eq.s32.totalorder %s23, 0
      %p196 = por %p194, %p195
      %p197 = scmp.ne.s32.totalorder %s183, %s184
      %p198 = scmp.eq.s32.totalorder %s24, 1
      %p199 = por %p197, %p198
      %p201 = scmp.ne.s32.totalorder %s184, %s200
      %p202 = scmp.eq.s32.totalorder %s24, 0
      %p203 = por %p201, %p202
      %p204 = scmp.le.s32.totalorder 1, %s18
      %p205 = scmp.lt.s32.totalorder %s18, 3
      %p206 = pnand %p204, %p205
      %p207 = pneg %p206
      // Predicated region
      $region9: #{tpu_custom_call.1} parent=5 // pred_check
        _
      $region10: #{tpu_custom_call.1} parent=5 // pred_check_branch
        %209 = sbr.rel (%p206) target = $region12
      $region11: #{tpu_custom_call.1} parent=5 // pred_region
        %s210 = ssub.s32 %s18, 1
        // Predicated region
        $region13: #{tpu_custom_call.1} parent=11 // pred_check
          %p211 = pneg %p65
        $region14: #{tpu_custom_call.1} parent=11 // pred_check_branch
          %213 = sbr.rel (%p211) target = $region16
        $region15: #{tpu_custom_call.1} parent=11 // pred_region
          _
        $region16: #{tpu_custom_call.1} parent=11 // pred_fallthru
          _
        // Predicated region
        $region17: #{tpu_custom_call.1} parent=11 // pred_check
          %p214 = pneg %p86
        $region18: #{tpu_custom_call.1} parent=11 // pred_check_branch
          %216 = sbr.rel (%p214) target = $region20
        $region19: #{tpu_custom_call.1} parent=11 // pred_region
          _
        $region20: #{tpu_custom_call.1} parent=11 // pred_fallthru
          _
        // Predicated region
        $region21: #{tpu_custom_call.1} parent=11 // pred_check
          %p217 = pneg %p107
        $region22: #{tpu_custom_call.1} parent=11 // pred_check_branch
          %219 = sbr.rel (%p217) target = $region24
        $region23: #{tpu_custom_call.1} parent=11 // pred_region
          _
        $region24: #{tpu_custom_call.1} parent=11 // pred_fallthru
          _
        // Predicated region
        $region25: #{tpu_custom_call.1} parent=11 // pred_check
          %p220 = pneg %p128
        $region26: #{tpu_custom_call.1} parent=11 // pred_check_branch
          %222 = sbr.rel (%p220) target = $region28
        $region27: #{tpu_custom_call.1} parent=11 // pred_region
          _
        $region28: #{tpu_custom_call.1} parent=11 // pred_fallthru
          _
        // Predicated region
        $region29: #{tpu_custom_call.1} parent=11 // pred_check
          %p223 = pneg %p149
        $region30: #{tpu_custom_call.1} parent=11 // pred_check_branch
          %225 = sbr.rel (%p223) target = $region32
        $region31: #{tpu_custom_call.1} parent=11 // pred_region
          _
        $region32: #{tpu_custom_call.1} parent=11 // pred_fallthru
          _
        // Predicated region
        $region33: #{tpu_custom_call.1} parent=11 // pred_check
          %p226 = pneg %p170
        $region34: #{tpu_custom_call.1} parent=11 // pred_check_branch
          %228 = sbr.rel (%p226) target = $region36
        $region35: #{tpu_custom_call.1} parent=11 // pred_region
          _
        $region36: #{tpu_custom_call.1} parent=11 // pred_fallthru
          _
      $region12: #{tpu_custom_call.1} parent=5 // pred_fallthru
        _
      %p229 = scmp.lt.s32.totalorder %s18, 2
      // Predicated region
      $region37: #{tpu_custom_call.1} parent=5 // pred_check
        %p230 = pneg %p229
      $region38: #{tpu_custom_call.1} parent=5 // pred_check_branch
        %232 = sbr.rel (%p230) target = $region40
      $region39: #{tpu_custom_call.1} parent=5 // pred_region
        // Predicated region
        $region41: #{tpu_custom_call.1} parent=39 // pred_check
          %p233 = pneg %p38
        $region42: #{tpu_custom_call.1} parent=39 // pred_check_branch
          %235 = sbr.rel (%p233) target = $region44
        $region43: #{tpu_custom_call.1} parent=39 // pred_region
          %s236 = smul.u32 4, %s18
          %p237 = scmp.lt.s32.totalorder %s236, 7
          %s238 = scalar_select %p237, %s236, 7
          %s239 = smul.addr %s238, 2
          %s240 = scalar_lea.vmem %s0, %s239
          %s241 = smul.u32 4, %s18
        $region44: #{tpu_custom_call.1} parent=39 // pred_fallthru
          _
      $region40: #{tpu_custom_call.1} parent=5 // pred_fallthru
        _
      %p242 = scmp.le.s32.totalorder 1, %s18
      %p243 = scmp.lt.s32.totalorder %s18, 3
      %p244 = pnand %p242, %p243
      %p245 = pneg %p244
      // Predicated region
      $region45: #{tpu_custom_call.1} parent=5 // pred_check
        _
      $region46: #{tpu_custom_call.1} parent=5 // pred_check_branch
        %247 = sbr.rel (%p244) target = $region48
      $region47: #{tpu_custom_call.1} parent=5 // pred_region
        %s248 = ssub.s32 %s18, 1
        %s249 = smul.u32 4, %s23
        %p250 = scmp.lt.s32.totalorder %s249, 7
        %s251 = scalar_select %p250, %s249, 7
        %s252 = smul.addr %s251, 2
        %s253 = scalar_lea.vmem %s0, %s252
        %p254 = pneg %p44
        %p255 = pneg %p41
        %p256 = pneg %p65
        %p257 = pneg %p62
        %p258 = pneg %p86
        %p259 = pneg %p83
        %p260 = pneg %p107
        %p261 = pneg %p104
        %p262 = pneg %p128
        %p263 = pneg %p125
        %p264 = pneg %p149
        %p265 = pneg %p146
        %p266 = pneg %p170
        %p267 = pneg %p167
        %p268 = pneg %p196
        %p269 = pneg %p193
        %s270 = sand.u32 %s183, 1
        %s271 = scalar_lea.sflag [#allocation4], %s270
        %s272 = sand.u32 %s183, 1
        %s273 = smul.addr %s272, 4
        %s274 = scalar_lea.vmem [#allocation3], %s273
        %s275 = smul.u32 4, %s23
        %p276 = scmp.lt.s32.totalorder %s275, 7
        %s277 = scalar_select %p276, %s275, 7
        %s278 = smul.addr %s277, 2
        %s279 = scalar_lea.vmem %s0, %s278
        %s280 = smul.u32 4, %s23
        %s281 = smul.u32 4, %s23
        %v282 = vld [vmem:[%s279] sm:$0xff]
        %v283 = vld [vmem:[%s1] sm:$0xff]
        %v284 = vld [vmem:[%s1 + $0x8] sm:$0xff]
        %v285 = vld [vmem:[%s1 + $0x10] sm:$0xff]
        %v286 = vld [vmem:[%s1 + $0x18] sm:$0xff]
        %v287 = vld [vmem:[%s2] sm:$0xff]
        %v288 = vld [vmem:[%s2 + $0x8] sm:$0xff]
        %v289 = vld [vmem:[%s2 + $0x10] sm:$0xff]
        %v290 = vld [vmem:[%s2 + $0x18] sm:$0xff]
        %292 = vset.pattern.permute.xlu0 0
        %293 = vperm.xlu0 %292, %v287
        %v294 = vpop.permute.xlu0 %293
        %297 = vset.pattern.permute.xlu0 0
        %298 = vperm.xlu0 %297, %v288
        %v299 = vpop.permute.xlu0 %298
        %302 = vset.pattern.permute.xlu0 0
        %303 = vperm.xlu0 %302, %v289
        %v304 = vpop.permute.xlu0 %303
        %307 = vset.pattern.permute.xlu0 0
        %308 = vperm.xlu0 %307, %v290
        %v309 = vpop.permute.xlu0 %308
        %312 = vst [vmem:[#allocation1] ss:$4 sm:$0xff] %v282
        %v313 = vld.sshfl [vmem:[#allocation1] sm:$0xff pattern:$0x73625140]
        %v314 = vld.sshfl [vmem:[#allocation1 + $0x8] sm:$0xff pattern:$0x73625140]
        %v315 = vld.sshfl [vmem:[#allocation1 + $0x10] sm:$0xff pattern:$0x73625140]
        %v316 = vld.sshfl [vmem:[#allocation1 + $0x18] sm:$0xff pattern:$0x73625140]
        %vm317 = vcmask 15360
        %v319 = vsel %vm317, %v283, 0
        %v322 = vsel %vm317, %v284, 0
        %v325 = vsel %vm317, %v285, 0
        %v328 = vsel %vm317, %v286, 0
        %vm330 = vcmask 1041408
        %v331 = vsel %vm330, %v313, 0
        %v333 = vsel %vm330, %v314, 0
        %v335 = vsel %vm330, %v315, 0
        %v337 = vsel %vm330, %v316, 0
        %339 = vmatpush.msra.mxu0 0.0
        %340 = vmatpush.msra.mxu0 0.0
        %341 = vmatpush.msra.mxu0 0.0
        %342 = vmatpush.msra.mxu0 0.0
        %343 = vmatpush.msra.mxu0 0.0
        %344 = vmatpush.msra.mxu0 0.0
        %345 = vmatpush.msra.mxu0 0.0
        %346 = vmatpush.msra.mxu0 0.0
        %347 = vmatpush.msra.mxu0 0.0
        %348 = vmatpush.msra.mxu0 0.0
        %349 = vmatpush.msra.mxu0 0.0
        %350 = vmatpush.msra.mxu0 0.0
        %351 = vmatpush.msra.mxu0 0.0
        %352 = vmatpush.msra.mxu0 0.0
        %353 = vmatpush.msra.mxu0 0.0
        %354 = vmatpush.msra.mxu0 %v331
        %355 = vmatmul.f32.gmra.mxu0 %v319
        %v356 = vpop.f32.mrf.mxu0
        %v357 = vadd.f32 %v294, %v356
        %358 = vmatmul.f32.gmra.mxu0 %v322
        %v359 = vpop.f32.mrf.mxu0
        %v360 = vadd.f32 %v299, %v359
        %361 = vmatmul.f32.gmra.mxu0 %v325
        %v362 = vpop.f32.mrf.mxu0
        %v363 = vadd.f32 %v304, %v362
        %364 = vmatmul.f32.gmra.mxu0 %v328
        %v365 = vpop.f32.mrf.mxu0
        %v366 = vadd.f32 %v309, %v365
        %367 = vdwg.mxu0
        %368 = vmatpush.msra.mxu0 0.0
        %369 = vmatpush.msra.mxu0 0.0
        %370 = vmatpush.msra.mxu0 0.0
        %371 = vmatpush.msra.mxu0 0.0
        %372 = vmatpush.msra.mxu0 0.0
        %373 = vmatpush.msra.mxu0 0.0
        %374 = vmatpush.msra.mxu0 0.0
        %375 = vmatpush.msra.mxu0 0.0
        %376 = vmatpush.msra.mxu0 0.0
        %377 = vmatpush.msra.mxu0 0.0
        %378 = vmatpush.msra.mxu0 0.0
        %379 = vmatpush.msra.mxu0 0.0
        %380 = vmatpush.msra.mxu0 0.0
        %381 = vmatpush.msra.mxu0 0.0
        %382 = vmatpush.msra.mxu0 0.0
        %383 = vmatpush.msra.mxu0 %v333
        %384 = vmatmul.f32.gmra.mxu0 %v319
        %v385 = vpop.f32.mrf.mxu0
        %v386 = vadd.f32 %v294, %v385
        %387 = vmatmul.f32.gmra.mxu0 %v322
        %v388 = vpop.f32.mrf.mxu0
        %v389 = vadd.f32 %v299, %v388
        %390 = vmatmul.f32.gmra.mxu0 %v325
        %v391 = vpop.f32.mrf.mxu0
        %v392 = vadd.f32 %v304, %v391
        %393 = vmatmul.f32.gmra.mxu0 %v328
        %v394 = vpop.f32.mrf.mxu0
        %v395 = vadd.f32 %v309, %v394
        %396 = vdwg.mxu0
        %397 = vmatpush.msra.mxu0 0.0
        %398 = vmatpush.msra.mxu0 0.0
        %399 = vmatpush.msra.mxu0 0.0
        %400 = vmatpush.msra.mxu0 0.0
        %401 = vmatpush.msra.mxu0 0.0
        %402 = vmatpush.msra.mxu0 0.0
        %403 = vmatpush.msra.mxu0 0.0
        %404 = vmatpush.msra.mxu0 0.0
        %405 = vmatpush.msra.mxu0 0.0
        %406 = vmatpush.msra.mxu0 0.0
        %407 = vmatpush.msra.mxu0 0.0
        %408 = vmatpush.msra.mxu0 0.0
        %409 = vmatpush.msra.mxu0 0.0
        %410 = vmatpush.msra.mxu0 0.0
        %411 = vmatpush.msra.mxu0 0.0
        %412 = vmatpush.msra.mxu0 %v335
        %413 = vmatmul.f32.gmra.mxu0 %v319
        %v414 = vpop.f32.mrf.mxu0
        %v415 = vadd.f32 %v294, %v414
        %416 = vmatmul.f32.gmra.mxu0 %v322
        %v417 = vpop.f32.mrf.mxu0
        %v418 = vadd.f32 %v299, %v417
        %419 = vmatmul.f32.gmra.mxu0 %v325
        %v420 = vpop.f32.mrf.mxu0
        %v421 = vadd.f32 %v304, %v420
        %422 = vmatmul.f32.gmra.mxu0 %v328
        %v423 = vpop.f32.mrf.mxu0
        %v424 = vadd.f32 %v309, %v423
        %425 = vdwg.mxu0
        %426 = vmatpush.msra.mxu0 0.0
        %427 = vmatpush.msra.mxu0 0.0
        %428 = vmatpush.msra.mxu0 0.0
        %429 = vmatpush.msra.mxu0 0.0
        %430 = vmatpush.msra.mxu0 0.0
        %431 = vmatpush.msra.mxu0 0.0
        %432 = vmatpush.msra.mxu0 0.0
        %433 = vmatpush.msra.mxu0 0.0
        %434 = vmatpush.msra.mxu0 0.0
        %435 = vmatpush.msra.mxu0 0.0
        %436 = vmatpush.msra.mxu0 0.0
        %437 = vmatpush.msra.mxu0 0.0
        %438 = vmatpush.msra.mxu0 0.0
        %439 = vmatpush.msra.mxu0 0.0
        %440 = vmatpush.msra.mxu0 0.0
        %441 = vmatpush.msra.mxu0 %v337
        %442 = vmatmul.f32.gmra.mxu0 %v319
        %v443 = vpop.f32.mrf.mxu0
        %v444 = vadd.f32 %v294, %v443
        %445 = vmatmul.f32.gmra.mxu0 %v322
        %v446 = vpop.f32.mrf.mxu0
        %v447 = vadd.f32 %v299, %v446
        %448 = vmatmul.f32.gmra.mxu0 %v325
        %v449 = vpop.f32.mrf.mxu0
        %v450 = vadd.f32 %v304, %v449
        %451 = vmatmul.f32.gmra.mxu0 %v328
        %v452 = vpop.f32.mrf.mxu0
        %v453 = vadd.f32 %v309, %v452
        %454 = vdwg.mxu0
        %v455 = vtanh.pop %v357
        %v456 = vtanh.pop %v386
        %v457 = vtanh.pop %v415
        %v458 = vtanh.pop %v444
        %v459 = vtanh.pop %v360
        %v460 = vtanh.pop %v389
        %v461 = vtanh.pop %v418
        %v462 = vtanh.pop %v447
        %v463 = vtanh.pop %v363
        %v464 = vtanh.pop %v392
        %v465 = vtanh.pop %v421
        %v466 = vtanh.pop %v450
        %v467 = vtanh.pop %v366
        %v468 = vtanh.pop %v395
        %v469 = vtanh.pop %v424
        %v470 = vtanh.pop %v453
        %v471 = vld [vmem:[%s3] sm:$0xff]
        %v472 = vld [vmem:[%s3 + $0x8] sm:$0xff]
        %v473 = vld [vmem:[%s3 + $0x10] sm:$0xff]
        %v474 = vld [vmem:[%s3 + $0x18] sm:$0xff]
        %v475 = vld [vmem:[%s4] sm:$0xff]
        %v476 = vld [vmem:[%s4 + $0x8] sm:$0xff]
        %v477 = vld [vmem:[%s4 + $0x10] sm:$0xff]
        %v478 = vld [vmem:[%s4 + $0x18] sm:$0xff]
        %480 = vset.pattern.permute.xlu0 0
        %481 = vperm.xlu0 %480, %v475
        %v482 = vpop.permute.xlu0 %481
        %485 = vset.pattern.permute.xlu0 0
        %486 = vperm.xlu0 %485, %v476
        %v487 = vpop.permute.xlu0 %486
        %490 = vset.pattern.permute.xlu0 0
        %491 = vperm.xlu0 %490, %v477
        %v492 = vpop.permute.xlu0 %491
        %495 = vset.pattern.permute.xlu0 0
        %496 = vperm.xlu0 %495, %v478
        %v497 = vpop.permute.xlu0 %496
        %vm499 = vcmask 261120
        %v501 = vsel %vm499, %v471, 0
        %v504 = vsel %vm499, %v472, 0
        %v507 = vsel %vm499, %v473, 0
        %v510 = vsel %vm499, %v474, 0
        %512 = vmatpush.msra.mxu0 0.0
        %513 = vmatpush.msra.mxu0 0.0
        %514 = vmatpush.msra.mxu0 0.0
        %515 = vmatpush.msra.mxu0 0.0
        %516 = vmatpush.msra.mxu0 0.0
        %517 = vmatpush.msra.mxu0 0.0
        %518 = vmatpush.msra.mxu0 0.0
        %519 = vmatpush.msra.mxu0 0.0
        %520 = vmatpush.msra.mxu0 0.0
        %521 = vmatpush.msra.mxu0 0.0
        %522 = vmatpush.msra.mxu0 0.0
        %523 = vmatpush.msra.mxu0 0.0
        %524 = vmatpush.msra.mxu0 %v467
        %525 = vmatpush.msra.mxu0 %v463
        %526 = vmatpush.msra.mxu0 %v459
        %527 = vmatpush.msra.mxu0 %v455
        %528 = vmatmul.f32.gmra.mxu0 %v501
        %v529 = vpop.f32.mrf.mxu0
        %v530 = vadd.f32 %v482, %v529
        %531 = vmatmul.f32.gmra.mxu0 %v504
        %v532 = vpop.f32.mrf.mxu0
        %v533 = vadd.f32 %v487, %v532
        %534 = vmatmul.f32.gmra.mxu0 %v507
        %v535 = vpop.f32.mrf.mxu0
        %v536 = vadd.f32 %v492, %v535
        %537 = vmatmul.f32.gmra.mxu0 %v510
        %v538 = vpop.f32.mrf.mxu0
        %v539 = vadd.f32 %v497, %v538
        %540 = vdwg.mxu0
        %541 = vmatpush.msra.mxu0 0.0
        %542 = vmatpush.msra.mxu0 0.0
        %543 = vmatpush.msra.mxu0 0.0
        %544 = vmatpush.msra.mxu0 0.0
        %545 = vmatpush.msra.mxu0 0.0
        %546 = vmatpush.msra.mxu0 0.0
        %547 = vmatpush.msra.mxu0 0.0
        %548 = vmatpush.msra.mxu0 0.0
        %549 = vmatpush.msra.mxu0 0.0
        %550 = vmatpush.msra.mxu0 0.0
        %551 = vmatpush.msra.mxu0 0.0
        %552 = vmatpush.msra.mxu0 0.0
        %553 = vmatpush.msra.mxu0 %v468
        %554 = vmatpush.msra.mxu0 %v464
        %555 = vmatpush.msra.mxu0 %v460
        %556 = vmatpush.msra.mxu0 %v456
        %557 = vmatmul.f32.gmra.mxu0 %v501
        %v558 = vpop.f32.mrf.mxu0
        %v559 = vadd.f32 %v482, %v558
        %560 = vmatmul.f32.gmra.mxu0 %v504
        %v561 = vpop.f32.mrf.mxu0
        %v562 = vadd.f32 %v487, %v561
        %563 = vmatmul.f32.gmra.mxu0 %v507
        %v564 = vpop.f32.mrf.mxu0
        %v565 = vadd.f32 %v492, %v564
        %566 = vmatmul.f32.gmra.mxu0 %v510
        %v567 = vpop.f32.mrf.mxu0
        %v568 = vadd.f32 %v497, %v567
        %569 = vdwg.mxu0
        %570 = vmatpush.msra.mxu0 0.0
        %571 = vmatpush.msra.mxu0 0.0
        %572 = vmatpush.msra.mxu0 0.0
        %573 = vmatpush.msra.mxu0 0.0
        %574 = vmatpush.msra.mxu0 0.0
        %575 = vmatpush.msra.mxu0 0.0
        %576 = vmatpush.msra.mxu0 0.0
        %577 = vmatpush.msra.mxu0 0.0
        %578 = vmatpush.msra.mxu0 0.0
        %579 = vmatpush.msra.mxu0 0.0
        %580 = vmatpush.msra.mxu0 0.0
        %581 = vmatpush.msra.mxu0 0.0
        %582 = vmatpush.msra.mxu0 %v469
        %583 = vmatpush.msra.mxu0 %v465
        %584 = vmatpush.msra.mxu0 %v461
        %585 = vmatpush.msra.mxu0 %v457
        %586 = vmatmul.f32.gmra.mxu0 %v501
        %v587 = vpop.f32.mrf.mxu0
        %v588 = vadd.f32 %v482, %v587
        %589 = vmatmul.f32.gmra.mxu0 %v504
        %v590 = vpop.f32.mrf.mxu0
        %v591 = vadd.f32 %v487, %v590
        %592 = vmatmul.f32.gmra.mxu0 %v507
        %v593 = vpop.f32.mrf.mxu0
        %v594 = vadd.f32 %v492, %v593
        %595 = vmatmul.f32.gmra.mxu0 %v510
        %v596 = vpop.f32.mrf.mxu0
        %v597 = vadd.f32 %v497, %v596
        %598 = vdwg.mxu0
        %599 = vmatpush.msra.mxu0 0.0
        %600 = vmatpush.msra.mxu0 0.0
        %601 = vmatpush.msra.mxu0 0.0
        %602 = vmatpush.msra.mxu0 0.0
        %603 = vmatpush.msra.mxu0 0.0
        %604 = vmatpush.msra.mxu0 0.0
        %605 = vmatpush.msra.mxu0 0.0
        %606 = vmatpush.msra.mxu0 0.0
        %607 = vmatpush.msra.mxu0 0.0
        %608 = vmatpush.msra.mxu0 0.0
        %609 = vmatpush.msra.mxu0 0.0
        %610 = vmatpush.msra.mxu0 0.0
        %611 = vmatpush.msra.mxu0 %v470
        %612 = vmatpush.msra.mxu0 %v466
        %613 = vmatpush.msra.mxu0 %v462
        %614 = vmatpush.msra.mxu0 %v458
        %615 = vmatmul.f32.gmra.mxu0 %v501
        %v616 = vpop.f32.mrf.mxu0
        %v617 = vadd.f32 %v482, %v616
        %618 = vmatmul.f32.gmra.mxu0 %v504
        %v619 = vpop.f32.mrf.mxu0
        %v620 = vadd.f32 %v487, %v619
        %621 = vmatmul.f32.gmra.mxu0 %v507
        %v622 = vpop.f32.mrf.mxu0
        %v623 = vadd.f32 %v492, %v622
        %624 = vmatmul.f32.gmra.mxu0 %v510
        %v625 = vpop.f32.mrf.mxu0
        %v626 = vadd.f32 %v497, %v625
        %627 = vdwg.mxu0
        %v628 = vtanh.pop %v530
        %v629 = vtanh.pop %v559
        %v630 = vtanh.pop %v588
        %v631 = vtanh.pop %v617
        %v632 = vtanh.pop %v533
        %v633 = vtanh.pop %v562
        %v634 = vtanh.pop %v591
        %v635 = vtanh.pop %v620
        %v636 = vtanh.pop %v536
        %v637 = vtanh.pop %v565
        %v638 = vtanh.pop %v594
        %v639 = vtanh.pop %v623
        %v640 = vtanh.pop %v539
        %v641 = vtanh.pop %v568
        %v642 = vtanh.pop %v597
        %v643 = vtanh.pop %v626
        %v644 = vld [vmem:[%s5] sm:$0x1]
        %v645 = vld [vmem:[#allocation2] sm:$0x1]
        %647 = vset.pattern.permute.xlu0 0
        %648 = vperm.xlu0 %647, %v645
        %v649 = vpop.permute.xlu0 %648
        %v651 = vperm.slane %v649, 0
        %v653 = vsel %vm499, %v644, 0
        %655 = vmatpush.msra.mxu0 0.0
        %656 = vmatpush.msra.mxu0 0.0
        %657 = vmatpush.msra.mxu0 0.0
        %658 = vmatpush.msra.mxu0 0.0
        %659 = vmatpush.msra.mxu0 0.0
        %660 = vmatpush.msra.mxu0 0.0
        %661 = vmatpush.msra.mxu0 0.0
        %662 = vmatpush.msra.mxu0 0.0
        %663 = vmatpush.msra.mxu0 0.0
        %664 = vmatpush.msra.mxu0 0.0
        %665 = vmatpush.msra.mxu0 0.0
        %666 = vmatpush.msra.mxu0 0.0
        %667 = vmatpush.msra.mxu0 %v640
        %668 = vmatpush.msra.mxu0 %v636
        %669 = vmatpush.msra.mxu0 %v632
        %670 = vmatpush.msra.mxu0 %v628
        %671 = vmatmul.f32.gmra.mxu0 %v653
        %v672 = vpop.f32.mrf.mxu0
        %v673 = vadd.f32 %v651, %v672
        %674 = vdwg.mxu0
        %675 = vmatpush.msra.mxu0 0.0
        %676 = vmatpush.msra.mxu0 0.0
        %677 = vmatpush.msra.mxu0 0.0
        %678 = vmatpush.msra.mxu0 0.0
        %679 = vmatpush.msra.mxu0 0.0
        %680 = vmatpush.msra.mxu0 0.0
        %681 = vmatpush.msra.mxu0 0.0
        %682 = vmatpush.msra.mxu0 0.0
        %683 = vmatpush.msra.mxu0 0.0
        %684 = vmatpush.msra.mxu0 0.0
        %685 = vmatpush.msra.mxu0 0.0
        %686 = vmatpush.msra.mxu0 0.0
        %687 = vmatpush.msra.mxu0 %v641
        %688 = vmatpush.msra.mxu0 %v637
        %689 = vmatpush.msra.mxu0 %v633
        %690 = vmatpush.msra.mxu0 %v629
        %691 = vmatmul.f32.gmra.mxu0 %v653
        %v692 = vpop.f32.mrf.mxu0
        %v693 = vadd.f32 %v651, %v692
        %694 = vdwg.mxu0
        %695 = vmatpush.msra.mxu0 0.0
        %696 = vmatpush.msra.mxu0 0.0
        %697 = vmatpush.msra.mxu0 0.0
        %698 = vmatpush.msra.mxu0 0.0
        %699 = vmatpush.msra.mxu0 0.0
        %700 = vmatpush.msra.mxu0 0.0
        %701 = vmatpush.msra.mxu0 0.0
        %702 = vmatpush.msra.mxu0 0.0
        %703 = vmatpush.msra.mxu0 0.0
        %704 = vmatpush.msra.mxu0 0.0
        %705 = vmatpush.msra.mxu0 0.0
        %706 = vmatpush.msra.mxu0 0.0
        %707 = vmatpush.msra.mxu0 %v642
        %708 = vmatpush.msra.mxu0 %v638
        %709 = vmatpush.msra.mxu0 %v634
        %710 = vmatpush.msra.mxu0 %v630
        %711 = vmatmul.f32.gmra.mxu0 %v653
        %v712 = vpop.f32.mrf.mxu0
        %v713 = vadd.f32 %v651, %v712
        %714 = vdwg.mxu0
        %715 = vmatpush.msra.mxu0 0.0
        %716 = vmatpush.msra.mxu0 0.0
        %717 = vmatpush.msra.mxu0 0.0
        %718 = vmatpush.msra.mxu0 0.0
        %719 = vmatpush.msra.mxu0 0.0
        %720 = vmatpush.msra.mxu0 0.0
        %721 = vmatpush.msra.mxu0 0.0
        %722 = vmatpush.msra.mxu0 0.0
        %723 = vmatpush.msra.mxu0 0.0
        %724 = vmatpush.msra.mxu0 0.0
        %725 = vmatpush.msra.mxu0 0.0
        %726 = vmatpush.msra.mxu0 0.0
        %727 = vmatpush.msra.mxu0 %v643
        %728 = vmatpush.msra.mxu0 %v639
        %729 = vmatpush.msra.mxu0 %v635
        %730 = vmatpush.msra.mxu0 %v631
        %731 = vmatmul.f32.gmra.mxu0 %v653
        %v732 = vpop.f32.mrf.mxu0
        %v733 = vadd.f32 %v651, %v732
        %734 = vdwg.mxu0
        %v739 = vrot.slane %v693, 7
        %v740 = vrot.slane %v713, 6
        %v741 = vrot.slane %v733, 5
        %vm742 = vcmask 1040384
        %v743 = vsel %vm742, %v673, %v739
        %vm744 = vcmask 1042434
        %v745 = vsel %vm744, %v740, %v741
        %v746 = vsel %vm330, %v743, %v745
        %v748 = vlaneseq
        %vm749 = vcmp.ge.s32.totalorder %v748, 0
        %vm750 = vcmp.lt.s32.totalorder %v748, 512
        %vm751 = vmand %vm749, %vm750
        %752 = vst.msk [vmem:[%s274] sm:$0xf] %vm751, %v746
        %s753 = sand.u32 %s183, 1
        %s754 = scalar_lea.sflag [#allocation4], %s753
        %s755 = sand.u32 %s183, 1
        %s756 = smul.addr %s755, 4
        %s757 = scalar_lea.vmem [#allocation3], %s756
        // Predicated region
        $region49: #{tpu_custom_call.1} parent=47 // pred_check
          %p758 = pneg %p193
        $region50: #{tpu_custom_call.1} parent=47 // pred_check_branch
          %760 = sbr.rel (%p758) target = $region52
        $region51: #{tpu_custom_call.1} parent=47 // pred_region
          %s761 = smul.u32 4, %s23
          %763 = vsyncadd %s754, 0
          %s764 = scalar_lea.hbm %s7, %s761
          %s766 = sshll.u32 %s757, 4
          %s767 = int_to_ptr.vmem [resolvable:$true] %s766
          %s768 = sshll.u32 %s764, 4
          %s769 = int_to_ptr.hbm [resolvable:$true] %s768
          %771 = dma.vmem_to_hbm [thread:$0]  %s767, 64, %s769, %s754
        $region52: #{tpu_custom_call.1} parent=47 // pred_fallthru
          _
      $region48: #{tpu_custom_call.1} parent=5 // pred_fallthru
        _
      %p772 = scmp.le.s32.totalorder 2, %s18
      // Predicated region
      $region53: #{tpu_custom_call.1} parent=5 // pred_check
        %p773 = pneg %p772
      $region54: #{tpu_custom_call.1} parent=5 // pred_check_branch
        %775 = sbr.rel (%p773) target = $region56
      $region55: #{tpu_custom_call.1} parent=5 // pred_region
        %s776 = ssub.s32 %s18, 2
        // Predicated region
        $region57: #{tpu_custom_call.1} parent=55 // pred_check
          %p777 = pneg %p199
        $region58: #{tpu_custom_call.1} parent=55 // pred_check_branch
          %779 = sbr.rel (%p777) target = $region60
        $region59: #{tpu_custom_call.1} parent=55 // pred_region
          %s780 = sand.u32 %s184, 1
          %s781 = scalar_lea.sflag [#allocation4], %s780
          %s782 = sand.u32 %s184, 1
          %s783 = smul.addr %s782, 4
          %s784 = scalar_lea.vmem [#allocation3], %s783
          %786 = dma.done %s781, 64
        $region60: #{tpu_custom_call.1} parent=55 // pred_fallthru
          _
      $region56: #{tpu_custom_call.1} parent=5 // pred_fallthru
        _
    $region6: #{tpu_custom_call.1} parent=1 // loop_footer
      %s22 = sadd.s32 1, %s18
    $region7: #{tpu_custom_call.1} parent=1 // loop_footer_branch
      %17 = sbr.rel target = $region3
    $region8: #{tpu_custom_call.1} parent=1 // loop_exit
      _
    %787 = vsyncpa [#allocation4], 1
    %s788 = scalar_lea.sflag [#allocation4], 1
    %789 = vsyncpa %s788, 1

</llo_original>
